<compile_context>
chip_gen: v6e
topology: v6e:2x2x1
jax: 0.10.0
libtpu: 0.0.40
codegen_flags: <defaults>
</compile_context>

<pallas_src>
import numpy as np
import jax
import jax.numpy as jnp
from jax.experimental import pallas as pl
from jax.experimental.pallas import tpu as pltpu


# ----------------------------- Pallas kernel -------------------------------

def _neg_scale_kernel(coeff_ref, g_ref, o_ref):
    # grad_in = -coeff * grad_out ; coeff kept in f32, result cast to out dtype.
    scale = -coeff_ref[0]                                   # f32 scalar (SMEM)
    o_ref[...] = (g_ref[...].astype(jnp.float32) * scale).astype(o_ref.dtype)


_LANES = 512      # lane-dense width (multiple of 128)
_TM_MAX = 512     # rows per tile -> 512*512*4B = 1 MiB per f32 block


def _round_up(a, b):
    return ((a + b - 1) // b) * b


def _neg_scale_pallas(g, coeff):
    """Compute (-coeff) * g with a tiled, lane-dense Pallas kernel."""
    orig_shape, orig_dtype = g.shape, g.dtype
    flat = g.reshape(-1)
    n = flat.shape[0]

    # Lane-dense 2D slab: (rows, lanes) with lanes a multiple of 128.
    lanes = _LANES if n >= _LANES else 128
    rows = _round_up(pl.cdiv(n, lanes), 8)        # sublane-aligned
    tm = min(_TM_MAX, rows)                       # both are multiples of 8
    rows = _round_up(rows, tm)                    # grid divides evenly
    pad = rows * lanes - n
    if pad:
        flat = jnp.pad(flat, (0, pad))
    slab = flat.reshape(rows, lanes)

    coeff_arr = jnp.asarray(coeff, dtype=jnp.float32).reshape((1,))

    out = pl.pallas_call(
        _neg_scale_kernel,
        out_shape=jax.ShapeDtypeStruct((rows, lanes), orig_dtype),
        grid=(rows // tm,),
        in_specs=[
            pl.BlockSpec(memory_space=pltpu.SMEM),            # coeff scalar
            pl.BlockSpec((tm, lanes), lambda i: (i, 0)),      # grad tile
        ],
        out_specs=pl.BlockSpec((tm, lanes), lambda i: (i, 0)),
        compiler_params=pltpu.CompilerParams(
            dimension_semantics=("parallel",)),
    )(coeff_arr, slab)

    return out.reshape(-1)[:n].reshape(orig_shape)


# ----------------------- gradient-reverse custom_vjp ------------------------

@jax.custom_vjp
def grad_reverse(x, coeff):
    # Forward: identity (PyTorch does `input * 1.0`, numerically identical).
    return x


def _grad_reverse_fwd(x, coeff):
    return x, coeff


def _grad_reverse_bwd(coeff, g):
    # Backward: grad_input = -coeff * grad_output (Pallas kernel).
    return (_neg_scale_pallas(g, coeff), jnp.zeros_like(coeff))


grad_reverse.defvjp(_grad_reverse_fwd, _grad_reverse_bwd)


# ----------------------------- module wrapper -------------------------------

class WarmStartGradientReverseLayer:
    """JAX/Pallas port of the PyTorch WarmStartGradientReverseLayer."""

    def __init__(self, alpha=1.0, lo=0.0, hi=1.0, max_iters=1000.0, auto_step=False):
        self.alpha = alpha
        self.lo = lo
        self.hi = hi
        self.iter_num = 0
        self.max_iters = max_iters
        self.auto_step = auto_step

    def coeff(self):
        return np.float32(
            2.0 * (self.hi - self.lo)
            / (1.0 + np.exp(-self.alpha * self.iter_num / self.max_iters))
            - (self.hi - self.lo)
            + self.lo
        )

    def __call__(self, x):
        coeff = jnp.asarray(self.coeff(), dtype=jnp.float32)
        if self.auto_step:
            self.step()
        return grad_reverse(x, coeff)

    def step(self):
        self.iter_num += 1


# --------------------------------- main --------------------------------------

if __name__ == "__main__":
    key = jax.random.PRNGKey(0)
    x = jax.random.normal(key, (2, 4, 16, 16), dtype=jnp.float32)  # NCHW

    # Forward pass: identity.
    layer = WarmStartGradientReverseLayer(
        alpha=1.0, lo=0.0, hi=1.0, max_iters=1000.0, auto_step=True
    )
    y = jax.block_until_ready(layer(x))
    assert y.shape == x.shape and y.dtype == x.dtype
    np.testing.assert_allclose(np.asarray(y), np.asarray(x), rtol=0, atol=0)

    # Gradient check (small tensor): grad = -coeff * upstream grad.
    layer2 = WarmStartGradientReverseLayer(auto_step=False)
    layer2.iter_num = 500  # nonzero warm-start coefficient
    expected_coeff = layer2.coeff()

    def loss_fn(inp):
        return jnp.sum(layer2(inp))

    g = jax.block_until_ready(jax.grad(loss_fn)(x))
    np.testing.assert_allclose(
        np.asarray(g),
        -expected_coeff * np.ones_like(np.asarray(x)),
        rtol=1e-6,
        atol=1e-6,
    )

    # Gradient check (larger tensor): exercises the multi-tile grid path.
    x_big = jax.random.normal(jax.random.PRNGKey(1), (8, 8, 64, 128),
                              dtype=jnp.float32)
    g_big = jax.block_until_ready(jax.grad(lambda t: jnp.sum(layer2(t)))(x_big))
    np.testing.assert_allclose(
        np.asarray(g_big),
        -expected_coeff * np.ones_like(np.asarray(x_big)),
        rtol=1e-6,
        atol=1e-6,
    )

    print("KERNEL_OK")
</pallas_src>

<mosaic_0001>
module attributes {stable_mosaic.version = 11 : i64} {
  func.func @_neg_scale_kernel(%arg0: i32, %arg1: memref<1xf32, #tpu.memory_space<smem>>, %arg2: memref<8x512xf32, #tpu.memory_space<vmem>>, %arg3: memref<8x512xf32, #tpu.memory_space<vmem>>) attributes {dimension_semantics = [#tpu.dimension_semantics<parallel>], iteration_bounds = array<i64: 1>, scalar_prefetch = 0 : i64, scratch_operands = 0 : i64, tpu.core_type = #tpu.core_type<tc>, window_params = [{transform_indices = @transform_0, window_bounds = array<i64: 1>}, {transform_indices = @transform_1, window_bounds = array<i64: 8, 512>}, {transform_indices = @transform_2, window_bounds = array<i64: 8, 512>}]} {
    %c0 = arith.constant 0 : index
    %0 = memref.load %arg1[%c0] : memref<1xf32, #tpu.memory_space<smem>>
    %cst = arith.constant 0.000000e+00 : f32
    %1 = arith.subf %cst, %0 : f32
    %c0_0 = arith.constant 0 : index
    %c0_1 = arith.constant 0 : index
    %2 = vector.load %arg2[%c0_0, %c0_1] : memref<8x512xf32, #tpu.memory_space<vmem>>, vector<8x512xf32>
    %3 = vector.broadcast %1 : f32 to vector<8x512xf32>
    %4 = arith.mulf %2, %3 : vector<8x512xf32>
    %c0_2 = arith.constant 0 : index
    %c0_3 = arith.constant 0 : index
    %5 = vector.load %arg3[%c0_2, %c0_3] : memref<8x512xf32, #tpu.memory_space<vmem>>, vector<8x512xf32>
    tpu.vector_store %arg3[%c0_2, %c0_3], %4 {strides = array<i32>} : memref<8x512xf32, #tpu.memory_space<vmem>>, vector<8x512xf32>,
    return
  }
  func.func @transform_0(%arg0: i32) -> i32 {
    %c0_i32 = arith.constant 0 : i32
    %c0_i32_0 = arith.constant 0 : i32
    return %c0_i32 : i32
  }
  func.func @transform_1(%arg0: i32) -> (i32, i32) {
    %c0_i32 = arith.constant 0 : i32
    %c0_i32_0 = arith.constant 0 : i32
    return %arg0, %c0_i32 : i32, i32
  }
  func.func @transform_2(%arg0: i32) -> (i32, i32) {
    %c0_i32 = arith.constant 0 : i32
    %c0_i32_0 = arith.constant 0 : i32
    return %arg0, %c0_i32 : i32, i32
  }
}

</mosaic_0001>

<llo_original>
// kernel: tpu_custom_call.1
$region0: #{tpu_custom_call.1}
  #allocation0 [shape = 'u32[]', space=smem, size = 0x4, offset = 0x4, fixed_abs, tag = 'smem constant byte address 0x4 - core index']
  #allocation1 [shape = 'u32[144,128]{1,0:T(1,128)}', space=vmem, size = 0x12000, scoped, tag = 'internal scratch']
  #allocation2 [shape = 'f32[1]{0:T(128)S(6)}', space=smem, size = 0x200, scoped, tag = 'scoped memory for tpu_custom_call.1']
  %s0 = inlined_call_operand.<no memory space> [shape: f32[1], index: 0, kind: input, shape index: {}]
  %s1 = inlined_call_operand.hbm [shape: f32[8,512], index: 1, kind: input, shape index: {}]
  %s2 = inlined_call_operand.hbm [shape: f32[8,512], index: 2, kind: output, shape index: {}]
  %s3 = sld [smem:[#allocation0]]
  $region22: #{tpu_custom_call.1} parent=0
    _
  %s5 = ssub.s32 1, %s3
  %s6 = scalar_select 0, %s5, %s3
  %7 = sst [smem:[#allocation2]] %s0
  $region1: #{tpu_custom_call.1} parent=0
    #allocation3 [shape = 'u8[16384]{0}', space=vmem, size = 0x4000, scoped, tag = 'input window, operand 1, single buffered']
    #allocation4 [shape = 's32[1]{0}', space=sflag, size = 0x4, scoped, tag = 'scoped memory for tpu_custom_call.1']
    #allocation5 [shape = 's32[1]{0}', space=sflag, size = 0x4, scoped, tag = 'scoped memory for tpu_custom_call.1']
    #allocation6 [shape = 'u8[16384]{0}', space=vmem, size = 0x4000, scoped, tag = 'output window, operand 0, single buffered']
    %8 = vsyncpa [#allocation4], 0
    %9 = vsyncpa [#allocation5], 0
    // Predicated region
    $region2: #{tpu_custom_call.1} parent=1 // pred_check
      _
    $region3: #{tpu_custom_call.1} parent=1 // pred_check_branch
      %11 = sbr.rel (0) target = $region5
    $region4: #{tpu_custom_call.1} parent=1 // pred_region
      _
    $region5: #{tpu_custom_call.1} parent=1 // pred_fallthru
      _
    // Predicated region
    $region6: #{tpu_custom_call.1} parent=1 // pred_check
      _
    $region7: #{tpu_custom_call.1} parent=1 // pred_check_branch
      %13 = sbr.rel (0) target = $region9
    $region8: #{tpu_custom_call.1} parent=1 // pred_region
      %s15 = ssub.s32 512, 512
      %16 = vsyncadd [#allocation4], %s15
      %s18 = sshll.u32 [#allocation3], 4
      %s19 = int_to_ptr.vmem [resolvable:$true] %s18
      %21 = dma.hbm_to_vmem [thread:$0]  %s1, 512, %s19, [#allocation4]
    $region9: #{tpu_custom_call.1} parent=1 // pred_fallthru
      _
    // Predicated region
    $region10: #{tpu_custom_call.1} parent=1 // pred_check
      _
    $region11: #{tpu_custom_call.1} parent=1 // pred_check_branch
      %23 = sbr.rel (0) target = $region13
    $region12: #{tpu_custom_call.1} parent=1 // pred_region
      %24 = dma.done [#allocation4], 512
    $region13: #{tpu_custom_call.1} parent=1 // pred_fallthru
      _
    %s25 = sld [smem:[#allocation2]]
    %s26 = ssub.f32 0.0, %s25
    %v27 = vld [vmem:[#allocation3] sm:$0xff]
    %v28 = vld [vmem:[#allocation3 + $0x8] sm:$0xff]
    %v29 = vld [vmem:[#allocation3 + $0x10] sm:$0xff]
    %v30 = vld [vmem:[#allocation3 + $0x18] sm:$0xff]
    %v31 = vstv %s26
    %v32 = vmul.f32 %v27, %v31
    %v33 = vmul.f32 %v28, %v31
    %v34 = vmul.f32 %v29, %v31
    %v35 = vmul.f32 %v30, %v31
    %36 = vst [vmem:[#allocation6] sm:$0xff] %v32
    %37 = vst [vmem:[#allocation6 + $0x8] sm:$0xff] %v33
    %38 = vst [vmem:[#allocation6 + $0x10] sm:$0xff] %v34
    %39 = vst [vmem:[#allocation6 + $0x18] sm:$0xff] %v35
    // Predicated region
    $region14: #{tpu_custom_call.1} parent=1 // pred_check
      _
    $region15: #{tpu_custom_call.1} parent=1 // pred_check_branch
      %41 = sbr.rel (0) target = $region17
    $region16: #{tpu_custom_call.1} parent=1 // pred_region
      %s43 = ssub.s32 512, 512
      %44 = vsyncadd [#allocation5], %s43
      %s46 = sshll.u32 [#allocation6], 4
      %s47 = int_to_ptr.vmem [resolvable:$true] %s46
      %49 = dma.vmem_to_hbm [thread:$0]  %s47, 512, %s2, [#allocation5]
    $region17: #{tpu_custom_call.1} parent=1 // pred_fallthru
      _
    // Predicated region
    $region18: #{tpu_custom_call.1} parent=1 // pred_check
      _
    $region19: #{tpu_custom_call.1} parent=1 // pred_check_branch
      %51 = sbr.rel (0) target = $region21
    $region20: #{tpu_custom_call.1} parent=1 // pred_region
      %52 = dma.done [#allocation5], 512
    $region21: #{tpu_custom_call.1} parent=1 // pred_fallthru
      _
    %53 = vsyncpa [#allocation4], 1
    %54 = vsyncpa [#allocation5], 1

</llo_original>
